<compile_context>
chip_gen: v7x
topology: tpu7x:2x2x1
jax: 0.10.0
libtpu: 0.0.40
codegen_flags: <defaults>
</compile_context>

<pallas_src>
import jax
import jax.numpy as jnp
from jax.experimental import pallas as pl
from jax.experimental.pallas import tpu as pltpu

C_IN = 256
C_OUT = 32
K = 16                     # deconv kernel size == stride == output spatial size
N_OUT = C_OUT * K * K      # 8192


def _pick_tn():
    """Column-tile width: single step on single-TC chips (v5e/v6e), 4 steps
    (tn=2048) on multi-TC chips (v7x, v4/v5p) so megacore can shard the weight
    stream and double-buffer per core. Any choice is VMEM-safe (<= 4 MiB)."""
    try:
        kind = jax.devices()[0].device_kind.lower()
    except Exception:
        return 2048
    single_tc = any(t in kind for t in
                    ("v5e", "v5 lite", "v5lite", "v6e", "v6 lite", "v6lite"))
    return N_OUT if single_tc else 2048


def _mask_branch_kernel(x_ref, w_ref, s_ref, b_ref, o_ref):
    # x: (tm, 256) f32 -> bf16 in-kernel (tiny, hidden under the weight DMA).
    x = x_ref[...].astype(jnp.bfloat16)
    # w: (256, tn) int8 -> bf16 (exact for values in [-127, 127]).
    w = w_ref[...].astype(jnp.bfloat16)
    acc = jnp.dot(x, w, preferred_element_type=jnp.float32)     # MXU, f32 acc
    # Per-output-column dequant scale, then bias (both broadcast over rows).
    o_ref[...] = (acc * s_ref[...] + b_ref[...]).astype(o_ref.dtype)


def prepare_mask_branch_params(weight, bias, *, tn=None):
    """One-time (init-time) packing of ConvTranspose2d params.

    weight: (256, 32, 16, 16) PyTorch ConvTranspose2d layout (C_in, C_out, kH, kW).
    bias:   (32,).
    Returns (w_packed int8 (n_tiles, 256, tn), scale f32 (1, 8192),
             b_flat f32 (1, 8192), tn).
    """
    if tn is None:
        tn = _pick_tn()
    assert N_OUT % tn == 0
    n_tiles = N_OUT // tn

    # W[ci, co, i, j] -> column index co*256 + i*16 + j (row-major over co,i,j).
    w_flat = weight.reshape(C_IN, N_OUT).astype(jnp.float32)

    # Symmetric per-output-column int8 quantization.
    scale = jnp.max(jnp.abs(w_flat), axis=0, keepdims=True) / 127.0   # (1, N_OUT)
    scale = jnp.maximum(scale, jnp.float32(1e-12))
    w_q = jnp.clip(jnp.round(w_flat / scale), -127.0, 127.0).astype(jnp.int8)

    # Pack so each grid step's weight DMA is one contiguous (256, tn) slab.
    w_packed = w_q.reshape(C_IN, n_tiles, tn).transpose(1, 0, 2)      # (n_tiles, 256, tn)

    b_flat = jnp.repeat(bias.astype(jnp.float32), K * K).reshape(1, N_OUT)
    return w_packed, scale, b_flat, tn


def mask_branch_forward(x, w_packed, scale, b_flat, *, out_dtype=jnp.float32):
    """x: any shape with numel divisible by 256 (mirrors x.reshape(-1,256,1,1)).
    Returns NCHW output (N, 32, 16, 16) in out_dtype (default f32)."""
    assert x.size % C_IN == 0, "input numel must be divisible by 256"
    n_tiles, _, tn = w_packed.shape

    x_flat = x.reshape(-1, C_IN)          # dtype cast happens inside the kernel
    m = x_flat.shape[0]

    # Guarded M tiling for large instance counts (caps the f32 output block in
    # VMEM); at small m the whole batch is one resident block.
    tm = 256 if (m > 256 and m % 256 == 0) else m
    m_tiles = m // tm

    # Grid: (column tiles, M tiles) with M innermost -> the weight/scale/bias
    # block indices are constant across inner M steps (fetched once per column
    # tile); both axes are independent -> "parallel" for megacore sharding.
    grid = (n_tiles, m_tiles)

    out_itemsize = jnp.dtype(out_dtype).itemsize
    cost = pl.CostEstimate(
        flops=2 * m * C_IN * N_OUT,
        transcendentals=0,
        bytes_accessed=(C_IN * N_OUT * 1              # int8 weight stream
                        + m * C_IN * 4                # f32 x
                        + 2 * N_OUT * 4               # f32 scale + bias rows
                        + m * N_OUT * out_itemsize),  # output
    )

    out = pl.pallas_call(
        _mask_branch_kernel,
        out_shape=jax.ShapeDtypeStruct((m, N_OUT), out_dtype),
        grid_spec=pltpu.PrefetchScalarGridSpec(
            num_scalar_prefetch=0,
            grid=grid,
            in_specs=[
                pl.BlockSpec((tm, C_IN), lambda j, i: (i, 0)),        # x row tile
                pl.BlockSpec((None, C_IN, tn), lambda j, i: (j, 0, 0)),  # contiguous weight slab
                pl.BlockSpec((1, tn), lambda j, i: (0, j)),           # dequant scale
                pl.BlockSpec((1, tn), lambda j, i: (0, j)),           # bias
            ],
            out_specs=pl.BlockSpec((tm, tn), lambda j, i: (i, j)),
        ),
        compiler_params=pltpu.CompilerParams(
            dimension_semantics=("parallel", "parallel")),
        cost_estimate=cost,
    )(x_flat, w_packed, scale, b_flat)

    return out.reshape(m, C_OUT, K, K)


if __name__ == "__main__":
    key = jax.random.PRNGKey(0)
    kx, kw, kb = jax.random.split(key, 3)

    # Parameters with ConvTranspose2d(256, 32, 16, 16) shapes.
    weight = jax.random.normal(kw, (C_IN, C_OUT, K, K), dtype=jnp.float32) * 0.02
    bias = jax.random.normal(kb, (C_OUT,), dtype=jnp.float32) * 0.02

    # Input: batch=2, 256 channels, 1x1 spatial (what the forward's reshape implies).
    x = jax.random.normal(kx, (2, 256, 1, 1), dtype=jnp.float32)

    # One-time param packing (module-state style), then jitted forward.
    w_packed, scale, b_flat, _ = prepare_mask_branch_params(weight, bias)
    fwd = jax.jit(mask_branch_forward)

    out = fwd(x, w_packed, scale, b_flat)
    out = jax.block_until_ready(out)
    assert out.shape == (2, 32, 16, 16), out.shape

    # Pure-JAX f32 reference of the transposed-conv-as-matmul semantics.
    # Tolerance accounts for the int8 (per-column scaled) weight stream and the
    # bf16 activation cast; accumulation is f32.  Flag if bit-accurate parity
    # with the PyTorch f32 ConvTranspose2d is required.
    ref = (jnp.einsum('nc,cohw->nohw', x.reshape(-1, C_IN), weight)
           + bias[None, :, None, None])
    assert jnp.allclose(out, ref, atol=3e-2, rtol=2e-2), float(
        jnp.max(jnp.abs(out - ref)))

    print("KERNEL_OK")
</pallas_src>

<mosaic_0001>
module attributes {stable_mosaic.version = 11 : i64} {
  func.func @_mask_branch_kernel(%arg0: i32, %arg1: i32, %arg2: memref<2x256xf32, #tpu.memory_space<vmem>>, %arg3: memref<1x256x2048xi8, #tpu.memory_space<vmem>>, %arg4: memref<1x2048xf32, #tpu.memory_space<vmem>>, %arg5: memref<1x2048xf32, #tpu.memory_space<vmem>>, %arg6: memref<2x2048xf32, #tpu.memory_space<vmem>>) attributes {dimension_semantics = [#tpu.dimension_semantics<parallel>, #tpu.dimension_semantics<parallel>], iteration_bounds = array<i64: 4, 1>, scalar_prefetch = 0 : i64, scratch_operands = 0 : i64, tpu.core_type = #tpu.core_type<tc>, window_params = [{transform_indices = @transform_0, window_bounds = array<i64: 2, 256>}, {transform_indices = @transform_1, window_bounds = array<i64: 1, 256, 2048>}, {transform_indices = @transform_2, window_bounds = array<i64: 1, 2048>}, {transform_indices = @transform_3, window_bounds = array<i64: 1, 2048>}, {transform_indices = @transform_4, window_bounds = array<i64: 2, 2048>}]} {
    %c0 = arith.constant 0 : index
    %c0_0 = arith.constant 0 : index
    %0 = vector.load %arg2[%c0, %c0_0] : memref<2x256xf32, #tpu.memory_space<vmem>>, vector<2x256xf32>
    %1 = arith.truncf %0 : vector<2x256xf32> to vector<2x256xbf16>
    %c0_1 = arith.constant 0 : index
    %c0_2 = arith.constant 0 : index
    %c0_3 = arith.constant 0 : index
    %2 = vector.load %arg3[%c0_1, %c0_2, %c0_3] : memref<1x256x2048xi8, #tpu.memory_space<vmem>>, vector<1x256x2048xi8>
    %3 = vector.shape_cast %2 : vector<1x256x2048xi8> to vector<256x2048xi8>
    %4 = arith.sitofp %3 : vector<256x2048xi8> to vector<256x2048xbf16>
    %cst = arith.constant dense<0.000000e+00> : vector<2x2048xf32>
    %5 = tpu.matmul %1, %4, %cst {dimension_numbers = #tpu.dot_dimension_numbers<[1], [0], [0], [1], [0, 0, 1, 1], [], []>} : vector<2x256xbf16>, vector<256x2048xbf16>, vector<2x2048xf32> -> vector<2x2048xf32>
    %c0_4 = arith.constant 0 : index
    %c0_5 = arith.constant 0 : index
    %6 = vector.load %arg4[%c0_4, %c0_5] : memref<1x2048xf32, #tpu.memory_space<vmem>>, vector<1x2048xf32>
    %7 = vector.broadcast %6 : vector<1x2048xf32> to vector<2x2048xf32>
    %8 = arith.mulf %5, %7 : vector<2x2048xf32>
    %c0_6 = arith.constant 0 : index
    %c0_7 = arith.constant 0 : index
    %9 = vector.load %arg5[%c0_6, %c0_7] : memref<1x2048xf32, #tpu.memory_space<vmem>>, vector<1x2048xf32>
    %10 = vector.broadcast %9 : vector<1x2048xf32> to vector<2x2048xf32>
    %11 = arith.addf %8, %10 : vector<2x2048xf32>
    %c0_8 = arith.constant 0 : index
    %c0_9 = arith.constant 0 : index
    %12 = vector.load %arg6[%c0_8, %c0_9] : memref<2x2048xf32, #tpu.memory_space<vmem>>, vector<2x2048xf32>
    tpu.vector_store %arg6[%c0_8, %c0_9], %11 {strides = array<i32>} : memref<2x2048xf32, #tpu.memory_space<vmem>>, vector<2x2048xf32>,
    return
  }
  func.func @transform_0(%arg0: i32, %arg1: i32) -> (i32, i32) {
    %c0_i32 = arith.constant 0 : i32
    %c0_i32_0 = arith.constant 0 : i32
    return %arg1, %c0_i32 : i32, i32
  }
  func.func @transform_1(%arg0: i32, %arg1: i32) -> (i32, i32, i32) {
    %c0_i32 = arith.constant 0 : i32
    %c0_i32_0 = arith.constant 0 : i32
    %c0_i32_1 = arith.constant 0 : i32
    return %arg0, %c0_i32, %c0_i32_0 : i32, i32, i32
  }
  func.func @transform_2(%arg0: i32, %arg1: i32) -> (i32, i32) {
    %c0_i32 = arith.constant 0 : i32
    %c0_i32_0 = arith.constant 0 : i32
    return %c0_i32, %arg0 : i32, i32
  }
  func.func @transform_3(%arg0: i32, %arg1: i32) -> (i32, i32) {
    %c0_i32 = arith.constant 0 : i32
    %c0_i32_0 = arith.constant 0 : i32
    return %c0_i32, %arg0 : i32, i32
  }
  func.func @transform_4(%arg0: i32, %arg1: i32) -> (i32, i32) {
    %c0_i32 = arith.constant 0 : i32
    return %arg1, %arg0 : i32, i32
  }
}

</mosaic_0001>

<llo_original>
// kernel: mask_branch_forward.1
$region0: #{mask_branch_forward.1}
  #allocation0 [shape = 'u32[]', space=smem, size = 0x4, offset = 0x4, fixed_abs, tag = 'smem constant byte address 0x4 - core index']
  #allocation1 [shape = 'u32[144,128]{1,0:T(1,128)}', space=vmem, size = 0x12000, scoped, tag = 'internal scratch']
  %s0 = inlined_call_operand.vmem [shape: f32[2,256], index: 0, kind: input, shape index: {}]
  %s1 = inlined_call_operand.hbm [shape: s8[4,256,2048], index: 1, kind: input, shape index: {}]
  %s2 = inlined_call_operand.hbm [shape: f32[1,8192], index: 2, kind: input, shape index: {}]
  %s3 = inlined_call_operand.hbm [shape: f32[1,8192], index: 3, kind: input, shape index: {}]
  %s4 = inlined_call_operand.vmem [shape: f32[2,8192], index: 4, kind: output, shape index: {}]
  %s5 = sld [smem:[#allocation0]]
  $region61: #{mask_branch_forward.1} parent=0
    _
  %s7 = ssub.s32 1, %s5
  %s8 = scalar_select 0, %s7, %s5
  $region1: #{mask_branch_forward.1} parent=0
    #allocation2 [shape = 'u8[1048576]{0}', space=vmem, size = 0x100000, scoped, tag = 'input window, operand 1']
    #allocation3 [shape = 's32[2]{0}', space=sflag, size = 0x8, scoped, tag = 'scoped memory for mask_branch_forward.1']
    #allocation4 [shape = 'u8[16384]{0}', space=vmem, size = 0x4000, scoped, tag = 'input window, operand 2']
    #allocation5 [shape = 's32[2]{0}', space=sflag, size = 0x8, scoped, tag = 'scoped memory for mask_branch_forward.1']
    #allocation6 [shape = 'u8[16384]{0}', space=vmem, size = 0x4000, scoped, tag = 'input window, operand 3']
    %9 = vsyncpa [#allocation3], 0
    %s10 = scalar_lea.sflag [#allocation3], 1
    %11 = vsyncpa %s10, 0
    %12 = vsyncpa [#allocation5], 0
    %s13 = scalar_lea.sflag [#allocation5], 1
    %14 = vsyncpa %s13, 0
    loop: start=0, step=1, limit=6
    $region2: #{mask_branch_forward.1} parent=1 // loop_pre_header
      _
    $region3: #{mask_branch_forward.1} parent=1 // loop_header
      %s16 = sphi 0, %s20
      %p17 = scmp.ge.s32.totalorder %s16, 6
      %s23 = sphi 0, %s35
      %s24 = sphi 0, %s31
      %s25 = sphi 0, %s23
      %s26 = sphi 0, %s24
      %s27 = sphi 0, %s25
      %s28 = sphi 0, %s26
      %s38 = sphi 0, %s40
      %s41 = sphi 0, %s38
      %s42 = sphi 0, %s41
      %s58 = sphi 0, %s42
      %s64 = sphi 0, %s66
      %s67 = sphi 0, %s64
      %s68 = sphi 0, %s67
      %s84 = sphi 0, %s68
      %s90 = sphi 0, %s92
      %s93 = sphi 0, %s90
      %s94 = sphi 0, %s93
      %s110 = sphi 0, %s94
      %s116 = sphi 0, %s118
      %s119 = sphi 0, %s116
      %s120 = sphi 0, %s119
      %s136 = sphi 0, %s120
      %s144 = sphi 0, %s146
      %s147 = sphi 0, %s144
      %s148 = sphi 0, %s147
      %s164 = sphi 0, %s148
    $region4: #{mask_branch_forward.1} parent=1 // loop_header_branch
      %19 = sbr.rel (%p17) target = $region8
    $region5: #{mask_branch_forward.1} parent=1 // loop_body
      %s21 = ssub.s32 %s16, 1
      %s22 = ssub.s32 %s16, 2
      %s29 = sadd.s32 1, %s24
      %p30 = scmp.ge.s32.totalorder %s29, 1
      %s31 = scalar_select %p30, 0, %s29
      %s32 = sadd.s32 1, %s23
      %s33 = scalar_select %p30, %s32, %s23
      %p34 = scmp.ge.s32.totalorder %s33, 4
      %s35 = scalar_select %p34, 0, %s33
      %s36 = ssub.s32 %s24, %s31
      %p37 = scmp.eq.s32.totalorder %s36, 0
      %s39 = sadd.s32 %s38, 1
      %s40 = scalar_select %p37, %s38, %s39
      %p43 = pneg %p37
      %p44 = scmp.eq.s32.totalorder %s16, 3
      %p45 = por %p43, %p44
      %p46 = scmp.ne.s32.totalorder %s38, %s41
      %p47 = scmp.eq.s32.totalorder %s16, 0
      %p48 = por %p46, %p47
      %p49 = scmp.ne.s32.totalorder %s38, %s41
      %p50 = scmp.eq.s32.totalorder %s21, 3
      %p51 = por %p49, %p50
      %p52 = scmp.ne.s32.totalorder %s41, %s42
      %p53 = scmp.eq.s32.totalorder %s21, 0
      %p54 = por %p52, %p53
      %p55 = scmp.ne.s32.totalorder %s41, %s42
      %p56 = scmp.eq.s32.totalorder %s22, 3
      %p57 = por %p55, %p56
      %p59 = scmp.ne.s32.totalorder %s42, %s58
      %p60 = scmp.eq.s32.totalorder %s22, 0
      %p61 = por %p59, %p60
      %s62 = ssub.s32 %s23, %s35
      %p63 = scmp.eq.s32.totalorder %s62, 0
      %s65 = sadd.s32 %s64, 1
      %s66 = scalar_select %p63, %s64, %s65
      %p69 = pneg %p63
      %p70 = scmp.eq.s32.totalorder %s16, 3
      %p71 = por %p69, %p70
      %p72 = scmp.ne.s32.totalorder %s64, %s67
      %p73 = scmp.eq.s32.totalorder %s16, 0
      %p74 = por %p72, %p73
      %p75 = scmp.ne.s32.totalorder %s64, %s67
      %p76 = scmp.eq.s32.totalorder %s21, 3
      %p77 = por %p75, %p76
      %p78 = scmp.ne.s32.totalorder %s67, %s68
      %p79 = scmp.eq.s32.totalorder %s21, 0
      %p80 = por %p78, %p79
      %p81 = scmp.ne.s32.totalorder %s67, %s68
      %p82 = scmp.eq.s32.totalorder %s22, 3
      %p83 = por %p81, %p82
      %p85 = scmp.ne.s32.totalorder %s68, %s84
      %p86 = scmp.eq.s32.totalorder %s22, 0
      %p87 = por %p85, %p86
      %s88 = ssub.s32 %s23, %s35
      %p89 = scmp.eq.s32.totalorder %s88, 0
      %s91 = sadd.s32 %s90, 1
      %s92 = scalar_select %p89, %s90, %s91
      %p95 = pneg %p89
      %p96 = scmp.eq.s32.totalorder %s16, 3
      %p97 = por %p95, %p96
      %p98 = scmp.ne.s32.totalorder %s90, %s93
      %p99 = scmp.eq.s32.totalorder %s16, 0
      %p100 = por %p98, %p99
      %p101 = scmp.ne.s32.totalorder %s90, %s93
      %p102 = scmp.eq.s32.totalorder %s21, 3
      %p103 = por %p101, %p102
      %p104 = scmp.ne.s32.totalorder %s93, %s94
      %p105 = scmp.eq.s32.totalorder %s21, 0
      %p106 = por %p104, %p105
      %p107 = scmp.ne.s32.totalorder %s93, %s94
      %p108 = scmp.eq.s32.totalorder %s22, 3
      %p109 = por %p107, %p108
      %p111 = scmp.ne.s32.totalorder %s94, %s110
      %p112 = scmp.eq.s32.totalorder %s22, 0
      %p113 = por %p111, %p112
      %s114 = ssub.s32 %s23, %s35
      %p115 = scmp.eq.s32.totalorder %s114, 0
      %s117 = sadd.s32 %s116, 1
      %s118 = scalar_select %p115, %s116, %s117
      %p121 = pneg %p115
      %p122 = scmp.eq.s32.totalorder %s16, 3
      %p123 = por %p121, %p122
      %p124 = scmp.ne.s32.totalorder %s116, %s119
      %p125 = scmp.eq.s32.totalorder %s16, 0
      %p126 = por %p124, %p125
      %p127 = scmp.ne.s32.totalorder %s116, %s119
      %p128 = scmp.eq.s32.totalorder %s21, 3
      %p129 = por %p127, %p128
      %p130 = scmp.ne.s32.totalorder %s119, %s120
      %p131 = scmp.eq.s32.totalorder %s21, 0
      %p132 = por %p130, %p131
      %p133 = scmp.ne.s32.totalorder %s119, %s120
      %p134 = scmp.eq.s32.totalorder %s22, 3
      %p135 = por %p133, %p134
      %p137 = scmp.ne.s32.totalorder %s120, %s136
      %p138 = scmp.eq.s32.totalorder %s22, 0
      %p139 = por %p137, %p138
      %s140 = ssub.s32 %s24, %s31
      %s141 = ssub.s32 %s23, %s35
      %s142 = sor.u32 %s140, %s141
      %p143 = scmp.eq.s32.totalorder %s142, 0
      %s145 = sadd.s32 %s144, 1
      %s146 = scalar_select %p143, %s144, %s145
      %p149 = pneg %p143
      %p150 = scmp.eq.s32.totalorder %s16, 3
      %p151 = por %p149, %p150
      %p152 = scmp.ne.s32.totalorder %s144, %s147
      %p153 = scmp.eq.s32.totalorder %s16, 0
      %p154 = por %p152, %p153
      %p155 = scmp.ne.s32.totalorder %s144, %s147
      %p156 = scmp.eq.s32.totalorder %s21, 3
      %p157 = por %p155, %p156
      %p158 = scmp.ne.s32.totalorder %s147, %s148
      %p159 = scmp.eq.s32.totalorder %s21, 0
      %p160 = por %p158, %p159
      %p161 = scmp.ne.s32.totalorder %s147, %s148
      %p162 = scmp.eq.s32.totalorder %s22, 3
      %p163 = por %p161, %p162
      %p165 = scmp.ne.s32.totalorder %s148, %s164
      %p166 = scmp.eq.s32.totalorder %s22, 0
      %p167 = por %p165, %p166
      %p168 = scmp.le.s32.totalorder 1, %s16
      %p169 = scmp.lt.s32.totalorder %s16, 5
      %p170 = pnand %p168, %p169
      %p171 = pneg %p170
      // Predicated region
      $region9: #{mask_branch_forward.1} parent=5 // pred_check
        _
      $region10: #{mask_branch_forward.1} parent=5 // pred_check_branch
        %173 = sbr.rel (%p170) target = $region12
      $region11: #{mask_branch_forward.1} parent=5 // pred_region
        %s174 = ssub.s32 %s16, 1
        // Predicated region
        $region13: #{mask_branch_forward.1} parent=11 // pred_check
          %p175 = pneg %p54
        $region14: #{mask_branch_forward.1} parent=11 // pred_check_branch
          %177 = sbr.rel (%p175) target = $region16
        $region15: #{mask_branch_forward.1} parent=11 // pred_region
          %p178 = scmp.lt.s32.totalorder %s26, 0
          %s179 = scalar_select %p178, %s26, 0
          %s180 = smul.addr %s179, 2
          %s181 = smul.addr %s180, 2
          %s182 = scalar_lea.vmem %s0, %s181
        $region16: #{mask_branch_forward.1} parent=11 // pred_fallthru
          _
      $region12: #{mask_branch_forward.1} parent=5 // pred_fallthru
        _
      %p183 = scmp.lt.s32.totalorder %s16, 4
      // Predicated region
      $region17: #{mask_branch_forward.1} parent=5 // pred_check
        %p184 = pneg %p183
      $region18: #{mask_branch_forward.1} parent=5 // pred_check_branch
        %186 = sbr.rel (%p184) target = $region20
      $region19: #{mask_branch_forward.1} parent=5 // pred_region
        // Predicated region
        $region21: #{mask_branch_forward.1} parent=19 // pred_check
          %p187 = pneg %p74
        $region22: #{mask_branch_forward.1} parent=19 // pred_check_branch
          %189 = sbr.rel (%p187) target = $region24
        $region23: #{mask_branch_forward.1} parent=19 // pred_region
          %s190 = sand.u32 %s64, 1
          %s191 = scalar_lea.sflag [#allocation3], %s190
          %s192 = sand.u32 %s64, 1
          %s193 = smul.addr %s192, 1024
          %s194 = scalar_lea.vmem [#allocation2], %s193
          %s196 = ssub.s32 16384, 16384
          %197 = vsyncadd %s191, %s196
          %s198 = smul.addr %s23, 128
          %s199 = smul.addr %s198, 128
          %s200 = scalar_lea.hbm %s1, %s199
          %s201 = sshll.u32 %s194, 4
          %s202 = int_to_ptr.vmem [resolvable:$true] %s201
          %207 = dma.hbm_to_vmem [thread:$0]  %s200, 16384, %s202, %s191, 2048, 2048, 128
        $region24: #{mask_branch_forward.1} parent=19 // pred_fallthru
          _
        // Predicated region
        $region25: #{mask_branch_forward.1} parent=19 // pred_check
          %p208 = pneg %p100
        $region26: #{mask_branch_forward.1} parent=19 // pred_check_branch
          %210 = sbr.rel (%p208) target = $region28
        $region27: #{mask_branch_forward.1} parent=19 // pred_region
          %s211 = sand.u32 %s16, 1
          %s212 = scalar_lea.sflag [#allocation5], %s211
          %s213 = sand.u32 %s90, 1
          %s214 = smul.addr %s213, 16
          %s215 = scalar_lea.vmem [#allocation4], %s214
          %s216 = smul.u32 16, %s23
          %s218 = ssub.s32 256, 256
          %219 = vsyncadd %s212, %s218
          %s220 = smul.addr %s216, 16
          %s221 = scalar_lea.hbm %s2, %s220
          %s223 = sshll.u32 %s215, 4
          %s224 = int_to_ptr.vmem [resolvable:$true] %s223
          %226 = dma.hbm_to_vmem [thread:$0]  %s221, 256, %s224, %s212
        $region28: #{mask_branch_forward.1} parent=19 // pred_fallthru
          _
        // Predicated region
        $region29: #{mask_branch_forward.1} parent=19 // pred_check
          %p227 = pneg %p126
        $region30: #{mask_branch_forward.1} parent=19 // pred_check_branch
          %229 = sbr.rel (%p227) target = $region32
        $region31: #{mask_branch_forward.1} parent=19 // pred_region
          %s230 = sand.u32 %s16, 1
          %s231 = scalar_lea.sflag [#allocation5], %s230
          %s232 = sand.u32 %s116, 1
          %s233 = smul.addr %s232, 16
          %s234 = scalar_lea.vmem [#allocation6], %s233
          %s235 = smul.u32 16, %s23
          %s237 = ssub.s32 256, 256
          %238 = vsyncadd %s231, %s237
          %s239 = smul.addr %s235, 16
          %s240 = scalar_lea.hbm %s3, %s239
          %s242 = sshll.u32 %s234, 4
          %s243 = int_to_ptr.vmem [resolvable:$true] %s242
          %245 = dma.hbm_to_vmem [thread:$0]  %s240, 256, %s243, %s231
        $region32: #{mask_branch_forward.1} parent=19 // pred_fallthru
          _
      $region20: #{mask_branch_forward.1} parent=5 // pred_fallthru
        _
      %p246 = scmp.le.s32.totalorder 1, %s16
      %p247 = scmp.lt.s32.totalorder %s16, 5
      %p248 = pnand %p246, %p247
      %p249 = pneg %p248
      // Predicated region
      $region33: #{mask_branch_forward.1} parent=5 // pred_check
        _
      $region34: #{mask_branch_forward.1} parent=5 // pred_check_branch
        %251 = sbr.rel (%p248) target = $region36
      $region35: #{mask_branch_forward.1} parent=5 // pred_region
        %s252 = ssub.s32 %s16, 1
        %s253 = sand.u32 %s67, 1
        %s254 = scalar_lea.sflag [#allocation3], %s253
        %s255 = sand.u32 %s67, 1
        %s256 = smul.addr %s255, 1024
        %s257 = scalar_lea.vmem [#allocation2], %s256
        // Predicated region
        $region37: #{mask_branch_forward.1} parent=35 // pred_check
          %p258 = pneg %p80
        $region38: #{mask_branch_forward.1} parent=35 // pred_check_branch
          %260 = sbr.rel (%p258) target = $region40
        $region39: #{mask_branch_forward.1} parent=35 // pred_region
          %261 = dma.done %s254, 16384
        $region40: #{mask_branch_forward.1} parent=35 // pred_fallthru
          _
        %s262 = sand.u32 %s21, 1
        %s263 = scalar_lea.sflag [#allocation5], %s262
        %s264 = sand.u32 %s93, 1
        %s265 = smul.addr %s264, 16
        %s266 = scalar_lea.vmem [#allocation4], %s265
        // Predicated region
        $region41: #{mask_branch_forward.1} parent=35 // pred_check
          %p267 = pneg %p106
        $region42: #{mask_branch_forward.1} parent=35 // pred_check_branch
          %269 = sbr.rel (%p267) target = $region44
        $region43: #{mask_branch_forward.1} parent=35 // pred_region
          %270 = dma.done %s263, 256
        $region44: #{mask_branch_forward.1} parent=35 // pred_fallthru
          _
        %s271 = sand.u32 %s21, 1
        %s272 = scalar_lea.sflag [#allocation5], %s271
        %s273 = sand.u32 %s119, 1
        %s274 = smul.addr %s273, 16
        %s275 = scalar_lea.vmem [#allocation6], %s274
        // Predicated region
        $region45: #{mask_branch_forward.1} parent=35 // pred_check
          %p276 = pneg %p132
        $region46: #{mask_branch_forward.1} parent=35 // pred_check_branch
          %278 = sbr.rel (%p276) target = $region48
        $region47: #{mask_branch_forward.1} parent=35 // pred_region
          %279 = dma.done %s272, 256
        $region48: #{mask_branch_forward.1} parent=35 // pred_fallthru
          _
        %p280 = scmp.lt.s32.totalorder %s26, 0
        %s281 = scalar_select %p280, %s26, 0
        %s282 = smul.addr %s281, 2
        %s283 = smul.addr %s282, 2
        %s284 = scalar_lea.vmem %s0, %s283
        %p285 = pneg %p54
        %p286 = pneg %p51
        %s287 = sand.u32 %s67, 1
        %s288 = scalar_lea.sflag [#allocation3], %s287
        %s289 = sand.u32 %s67, 1
        %s290 = smul.addr %s289, 1024
        %s291 = scalar_lea.vmem [#allocation2], %s290
        %p292 = pneg %p80
        %p293 = pneg %p77
        %s294 = sand.u32 %s21, 1
        %s295 = scalar_lea.sflag [#allocation5], %s294
        %s296 = sand.u32 %s93, 1
        %s297 = smul.addr %s296, 16
        %s298 = scalar_lea.vmem [#allocation4], %s297
        %p299 = pneg %p106
        %p300 = pneg %p103
        %s301 = sand.u32 %s21, 1
        %s302 = scalar_lea.sflag [#allocation5], %s301
        %s303 = sand.u32 %s119, 1
        %s304 = smul.addr %s303, 16
        %s305 = scalar_lea.vmem [#allocation6], %s304
        %p306 = pneg %p132
        %p307 = pneg %p129
        %p308 = pneg %p160
        %p309 = pneg %p157
        %s310 = smul.u32 16, %s25
        %p311 = scmp.lt.s32.totalorder %s26, 0
        %s312 = scalar_select %p311, %s26, 0
        %p313 = scmp.lt.s32.totalorder %s310, 63
        %s314 = scalar_select %p313, %s310, 63
        %s315 = smul.addr %s312, 64
        %s316 = sadd.s32 %s314, %s315
        %s317 = smul.addr %s316, 2
        %s318 = scalar_lea.vmem %s4, %s317
        %p319 = scmp.lt.s32.totalorder %s26, 0
        %s320 = scalar_select %p319, %s26, 0
        %s321 = smul.addr %s320, 2
        %s322 = smul.addr %s321, 2
        %s323 = scalar_lea.vmem %s0, %s322
        %s324 = smul.u32 16, %s25
        %s325 = smul.u32 16, %s25
        %s326 = smul.u32 16, %s25
        %p327 = scmp.lt.s32.totalorder %s26, 0
        %s328 = scalar_select %p327, %s26, 0
        %p329 = scmp.lt.s32.totalorder %s326, 63
        %s330 = scalar_select %p329, %s326, 63
        %s331 = smul.addr %s328, 64
        %s332 = sadd.s32 %s330, %s331
        %s333 = smul.addr %s332, 2
        %s334 = scalar_lea.vmem %s4, %s333
        %s335 = smul.u32 16, %s25
        %v336 = vld [vmem:[%s323] sm:$0xf]
        %v339 = vunpack.c.l.s4 1983009808
        %v340 = vunpack.c.0.s8 %v339
        %v341 = vlaneseq
        %v342 = vshrl.u32 %v341, 7
        %v343 = vsub.s32 %v340, %v342
        %v344 = vrot.slane %v336, %v343
        %v345 = vcombine.high %v344, %v344
        %v348 = vpack.c.bf16 %v344, %v344
        %v349 = vpack.c.bf16 %v345, %v345
        %v350 = vld [vmem:[%s257] sm:$0xff]
        %v351 = vld [vmem:[%s257 + $0x8] sm:$0xff]
        %v352 = vld [vmem:[%s257 + $0x10] sm:$0xff]
        %v353 = vld [vmem:[%s257 + $0x18] sm:$0xff]
        %v354 = vld [vmem:[%s257 + $0x20] sm:$0xff]
        %v355 = vld [vmem:[%s257 + $0x28] sm:$0xff]
        %v356 = vld [vmem:[%s257 + $0x30] sm:$0xff]
        %v357 = vld [vmem:[%s257 + $0x38] sm:$0xff]
        %v358 = vld [vmem:[%s257 + $0x40] sm:$0xff]
        %v359 = vld [vmem:[%s257 + $0x48] sm:$0xff]
        %v360 = vld [vmem:[%s257 + $0x50] sm:$0xff]
        %v361 = vld [vmem:[%s257 + $0x58] sm:$0xff]
        %v362 = vld [vmem:[%s257 + $0x60] sm:$0xff]
        %v363 = vld [vmem:[%s257 + $0x68] sm:$0xff]
        %v364 = vld [vmem:[%s257 + $0x70] sm:$0xff]
        %v365 = vld [vmem:[%s257 + $0x78] sm:$0xff]
        %v366 = vld [vmem:[%s257 + $0x80] sm:$0xff]
        %v367 = vld [vmem:[%s257 + $0x88] sm:$0xff]
        %v368 = vld [vmem:[%s257 + $0x90] sm:$0xff]
        %v369 = vld [vmem:[%s257 + $0x98] sm:$0xff]
        %v370 = vld [vmem:[%s257 + $0xa0] sm:$0xff]
        %v371 = vld [vmem:[%s257 + $0xa8] sm:$0xff]
        %v372 = vld [vmem:[%s257 + $0xb0] sm:$0xff]
        %v373 = vld [vmem:[%s257 + $0xb8] sm:$0xff]
        %v374 = vld [vmem:[%s257 + $0xc0] sm:$0xff]
        %v375 = vld [vmem:[%s257 + $0xc8] sm:$0xff]
        %v376 = vld [vmem:[%s257 + $0xd0] sm:$0xff]
        %v377 = vld [vmem:[%s257 + $0xd8] sm:$0xff]
        %v378 = vld [vmem:[%s257 + $0xe0] sm:$0xff]
        %v379 = vld [vmem:[%s257 + $0xe8] sm:$0xff]
        %v380 = vld [vmem:[%s257 + $0xf0] sm:$0xff]
        %v381 = vld [vmem:[%s257 + $0xf8] sm:$0xff]
        %v382 = vld [vmem:[%s257 + $0x100] sm:$0xff]
        %v383 = vld [vmem:[%s257 + $0x108] sm:$0xff]
        %v384 = vld [vmem:[%s257 + $0x110] sm:$0xff]
        %v385 = vld [vmem:[%s257 + $0x118] sm:$0xff]
        %v386 = vld [vmem:[%s257 + $0x120] sm:$0xff]
        %v387 = vld [vmem:[%s257 + $0x128] sm:$0xff]
        %v388 = vld [vmem:[%s257 + $0x130] sm:$0xff]
        %v389 = vld [vmem:[%s257 + $0x138] sm:$0xff]
        %v390 = vld [vmem:[%s257 + $0x140] sm:$0xff]
        %v391 = vld [vmem:[%s257 + $0x148] sm:$0xff]
        %v392 = vld [vmem:[%s257 + $0x150] sm:$0xff]
        %v393 = vld [vmem:[%s257 + $0x158] sm:$0xff]
        %v394 = vld [vmem:[%s257 + $0x160] sm:$0xff]
        %v395 = vld [vmem:[%s257 + $0x168] sm:$0xff]
        %v396 = vld [vmem:[%s257 + $0x170] sm:$0xff]
        %v397 = vld [vmem:[%s257 + $0x178] sm:$0xff]
        %v398 = vld [vmem:[%s257 + $0x180] sm:$0xff]
        %v399 = vld [vmem:[%s257 + $0x188] sm:$0xff]
        %v400 = vld [vmem:[%s257 + $0x190] sm:$0xff]
        %v401 = vld [vmem:[%s257 + $0x198] sm:$0xff]
        %v402 = vld [vmem:[%s257 + $0x1a0] sm:$0xff]
        %v403 = vld [vmem:[%s257 + $0x1a8] sm:$0xff]
        %v404 = vld [vmem:[%s257 + $0x1b0] sm:$0xff]
        %v405 = vld [vmem:[%s257 + $0x1b8] sm:$0xff]
        %v406 = vld [vmem:[%s257 + $0x1c0] sm:$0xff]
        %v407 = vld [vmem:[%s257 + $0x1c8] sm:$0xff]
        %v408 = vld [vmem:[%s257 + $0x1d0] sm:$0xff]
        %v409 = vld [vmem:[%s257 + $0x1d8] sm:$0xff]
        %v410 = vld [vmem:[%s257 + $0x1e0] sm:$0xff]
        %v411 = vld [vmem:[%s257 + $0x1e8] sm:$0xff]
        %v412 = vld [vmem:[%s257 + $0x1f0] sm:$0xff]
        %v413 = vld [vmem:[%s257 + $0x1f8] sm:$0xff]
        %v414 = vld [vmem:[%s257 + $0x200] sm:$0xff]
        %v415 = vld [vmem:[%s257 + $0x208] sm:$0xff]
        %v416 = vld [vmem:[%s257 + $0x210] sm:$0xff]
        %v417 = vld [vmem:[%s257 + $0x218] sm:$0xff]
        %v418 = vld [vmem:[%s257 + $0x220] sm:$0xff]
        %v419 = vld [vmem:[%s257 + $0x228] sm:$0xff]
        %v420 = vld [vmem:[%s257 + $0x230] sm:$0xff]
        %v421 = vld [vmem:[%s257 + $0x238] sm:$0xff]
        %v422 = vld [vmem:[%s257 + $0x240] sm:$0xff]
        %v423 = vld [vmem:[%s257 + $0x248] sm:$0xff]
        %v424 = vld [vmem:[%s257 + $0x250] sm:$0xff]
        %v425 = vld [vmem:[%s257 + $0x258] sm:$0xff]
        %v426 = vld [vmem:[%s257 + $0x260] sm:$0xff]
        %v427 = vld [vmem:[%s257 + $0x268] sm:$0xff]
        %v428 = vld [vmem:[%s257 + $0x270] sm:$0xff]
        %v429 = vld [vmem:[%s257 + $0x278] sm:$0xff]
        %v430 = vld [vmem:[%s257 + $0x280] sm:$0xff]
        %v431 = vld [vmem:[%s257 + $0x288] sm:$0xff]
        %v432 = vld [vmem:[%s257 + $0x290] sm:$0xff]
        %v433 = vld [vmem:[%s257 + $0x298] sm:$0xff]
        %v434 = vld [vmem:[%s257 + $0x2a0] sm:$0xff]
        %v435 = vld [vmem:[%s257 + $0x2a8] sm:$0xff]
        %v436 = vld [vmem:[%s257 + $0x2b0] sm:$0xff]
        %v437 = vld [vmem:[%s257 + $0x2b8] sm:$0xff]
        %v438 = vld [vmem:[%s257 + $0x2c0] sm:$0xff]
        %v439 = vld [vmem:[%s257 + $0x2c8] sm:$0xff]
        %v440 = vld [vmem:[%s257 + $0x2d0] sm:$0xff]
        %v441 = vld [vmem:[%s257 + $0x2d8] sm:$0xff]
        %v442 = vld [vmem:[%s257 + $0x2e0] sm:$0xff]
        %v443 = vld [vmem:[%s257 + $0x2e8] sm:$0xff]
        %v444 = vld [vmem:[%s257 + $0x2f0] sm:$0xff]
        %v445 = vld [vmem:[%s257 + $0x2f8] sm:$0xff]
        %v446 = vld [vmem:[%s257 + $0x300] sm:$0xff]
        %v447 = vld [vmem:[%s257 + $0x308] sm:$0xff]
        %v448 = vld [vmem:[%s257 + $0x310] sm:$0xff]
        %v449 = vld [vmem:[%s257 + $0x318] sm:$0xff]
        %v450 = vld [vmem:[%s257 + $0x320] sm:$0xff]
        %v451 = vld [vmem:[%s257 + $0x328] sm:$0xff]
        %v452 = vld [vmem:[%s257 + $0x330] sm:$0xff]
        %v453 = vld [vmem:[%s257 + $0x338] sm:$0xff]
        %v454 = vld [vmem:[%s257 + $0x340] sm:$0xff]
        %v455 = vld [vmem:[%s257 + $0x348] sm:$0xff]
        %v456 = vld [vmem:[%s257 + $0x350] sm:$0xff]
        %v457 = vld [vmem:[%s257 + $0x358] sm:$0xff]
        %v458 = vld [vmem:[%s257 + $0x360] sm:$0xff]
        %v459 = vld [vmem:[%s257 + $0x368] sm:$0xff]
        %v460 = vld [vmem:[%s257 + $0x370] sm:$0xff]
        %v461 = vld [vmem:[%s257 + $0x378] sm:$0xff]
        %v462 = vld [vmem:[%s257 + $0x380] sm:$0xff]
        %v463 = vld [vmem:[%s257 + $0x388] sm:$0xff]
        %v464 = vld [vmem:[%s257 + $0x390] sm:$0xff]
        %v465 = vld [vmem:[%s257 + $0x398] sm:$0xff]
        %v466 = vld [vmem:[%s257 + $0x3a0] sm:$0xff]
        %v467 = vld [vmem:[%s257 + $0x3a8] sm:$0xff]
        %v468 = vld [vmem:[%s257 + $0x3b0] sm:$0xff]
        %v469 = vld [vmem:[%s257 + $0x3b8] sm:$0xff]
        %v470 = vld [vmem:[%s257 + $0x3c0] sm:$0xff]
        %v471 = vld [vmem:[%s257 + $0x3c8] sm:$0xff]
        %v472 = vld [vmem:[%s257 + $0x3d0] sm:$0xff]
        %v473 = vld [vmem:[%s257 + $0x3d8] sm:$0xff]
        %v474 = vld [vmem:[%s257 + $0x3e0] sm:$0xff]
        %v475 = vld [vmem:[%s257 + $0x3e8] sm:$0xff]
        %v476 = vld [vmem:[%s257 + $0x3f0] sm:$0xff]
        %v477 = vld [vmem:[%s257 + $0x3f8] sm:$0xff]
        %v478 = vunpack.c.l.s8.bf16 %v350
        %v479 = vunpack.c.l.s8.bf16 %v351
        %v480 = vunpack.c.l.s8.bf16 %v352
        %v481 = vunpack.c.l.s8.bf16 %v353
        %v482 = vunpack.c.l.s8.bf16 %v354
        %v483 = vunpack.c.l.s8.bf16 %v355
        %v484 = vunpack.c.l.s8.bf16 %v356
        %v485 = vunpack.c.l.s8.bf16 %v357
        %v486 = vunpack.c.l.s8.bf16 %v358
        %v487 = vunpack.c.l.s8.bf16 %v359
        %v488 = vunpack.c.l.s8.bf16 %v360
        %v489 = vunpack.c.l.s8.bf16 %v361
        %v490 = vunpack.c.l.s8.bf16 %v362
        %v491 = vunpack.c.l.s8.bf16 %v363
        %v492 = vunpack.c.l.s8.bf16 %v364
        %v493 = vunpack.c.l.s8.bf16 %v365
        %v494 = vunpack.c.h.s8.bf16 %v350
        %v495 = vunpack.c.h.s8.bf16 %v351
        %v496 = vunpack.c.h.s8.bf16 %v352
        %v497 = vunpack.c.h.s8.bf16 %v353
        %v498 = vunpack.c.h.s8.bf16 %v354
        %v499 = vunpack.c.h.s8.bf16 %v355
        %v500 = vunpack.c.h.s8.bf16 %v356
        %v501 = vunpack.c.h.s8.bf16 %v357
        %v502 = vunpack.c.h.s8.bf16 %v358
        %v503 = vunpack.c.h.s8.bf16 %v359
        %v504 = vunpack.c.h.s8.bf16 %v360
        %v505 = vunpack.c.h.s8.bf16 %v361
        %v506 = vunpack.c.h.s8.bf16 %v362
        %v507 = vunpack.c.h.s8.bf16 %v363
        %v508 = vunpack.c.h.s8.bf16 %v364
        %v509 = vunpack.c.h.s8.bf16 %v365
        %v510 = vunpack.c.l.s8.bf16 %v366
        %v511 = vunpack.c.l.s8.bf16 %v367
        %v512 = vunpack.c.l.s8.bf16 %v368
        %v513 = vunpack.c.l.s8.bf16 %v369
        %v514 = vunpack.c.l.s8.bf16 %v370
        %v515 = vunpack.c.l.s8.bf16 %v371
        %v516 = vunpack.c.l.s8.bf16 %v372
        %v517 = vunpack.c.l.s8.bf16 %v373
        %v518 = vunpack.c.l.s8.bf16 %v374
        %v519 = vunpack.c.l.s8.bf16 %v375
        %v520 = vunpack.c.l.s8.bf16 %v376
        %v521 = vunpack.c.l.s8.bf16 %v377
        %v522 = vunpack.c.l.s8.bf16 %v378
        %v523 = vunpack.c.l.s8.bf16 %v379
        %v524 = vunpack.c.l.s8.bf16 %v380
        %v525 = vunpack.c.l.s8.bf16 %v381
        %v526 = vunpack.c.h.s8.bf16 %v366
        %v527 = vunpack.c.h.s8.bf16 %v367
        %v528 = vunpack.c.h.s8.bf16 %v368
        %v529 = vunpack.c.h.s8.bf16 %v369
        %v530 = vunpack.c.h.s8.bf16 %v370
        %v531 = vunpack.c.h.s8.bf16 %v371
        %v532 = vunpack.c.h.s8.bf16 %v372
        %v533 = vunpack.c.h.s8.bf16 %v373
        %v534 = vunpack.c.h.s8.bf16 %v374
        %v535 = vunpack.c.h.s8.bf16 %v375
        %v536 = vunpack.c.h.s8.bf16 %v376
        %v537 = vunpack.c.h.s8.bf16 %v377
        %v538 = vunpack.c.h.s8.bf16 %v378
        %v539 = vunpack.c.h.s8.bf16 %v379
        %v540 = vunpack.c.h.s8.bf16 %v380
        %v541 = vunpack.c.h.s8.bf16 %v381
        %v542 = vunpack.c.l.s8.bf16 %v382
        %v543 = vunpack.c.l.s8.bf16 %v383
        %v544 = vunpack.c.l.s8.bf16 %v384
        %v545 = vunpack.c.l.s8.bf16 %v385
        %v546 = vunpack.c.l.s8.bf16 %v386
        %v547 = vunpack.c.l.s8.bf16 %v387
        %v548 = vunpack.c.l.s8.bf16 %v388
        %v549 = vunpack.c.l.s8.bf16 %v389
        %v550 = vunpack.c.l.s8.bf16 %v390
        %v551 = vunpack.c.l.s8.bf16 %v391
        %v552 = vunpack.c.l.s8.bf16 %v392
        %v553 = vunpack.c.l.s8.bf16 %v393
        %v554 = vunpack.c.l.s8.bf16 %v394
        %v555 = vunpack.c.l.s8.bf16 %v395
        %v556 = vunpack.c.l.s8.bf16 %v396
        %v557 = vunpack.c.l.s8.bf16 %v397
        %v558 = vunpack.c.h.s8.bf16 %v382
        %v559 = vunpack.c.h.s8.bf16 %v383
        %v560 = vunpack.c.h.s8.bf16 %v384
        %v561 = vunpack.c.h.s8.bf16 %v385
        %v562 = vunpack.c.h.s8.bf16 %v386
        %v563 = vunpack.c.h.s8.bf16 %v387
        %v564 = vunpack.c.h.s8.bf16 %v388
        %v565 = vunpack.c.h.s8.bf16 %v389
        %v566 = vunpack.c.h.s8.bf16 %v390
        %v567 = vunpack.c.h.s8.bf16 %v391
        %v568 = vunpack.c.h.s8.bf16 %v392
        %v569 = vunpack.c.h.s8.bf16 %v393
        %v570 = vunpack.c.h.s8.bf16 %v394
        %v571 = vunpack.c.h.s8.bf16 %v395
        %v572 = vunpack.c.h.s8.bf16 %v396
        %v573 = vunpack.c.h.s8.bf16 %v397
        %v574 = vunpack.c.l.s8.bf16 %v398
        %v575 = vunpack.c.l.s8.bf16 %v399
        %v576 = vunpack.c.l.s8.bf16 %v400
        %v577 = vunpack.c.l.s8.bf16 %v401
        %v578 = vunpack.c.l.s8.bf16 %v402
        %v579 = vunpack.c.l.s8.bf16 %v403
        %v580 = vunpack.c.l.s8.bf16 %v404
        %v581 = vunpack.c.l.s8.bf16 %v405
        %v582 = vunpack.c.l.s8.bf16 %v406
        %v583 = vunpack.c.l.s8.bf16 %v407
        %v584 = vunpack.c.l.s8.bf16 %v408
        %v585 = vunpack.c.l.s8.bf16 %v409
        %v586 = vunpack.c.l.s8.bf16 %v410
        %v587 = vunpack.c.l.s8.bf16 %v411
        %v588 = vunpack.c.l.s8.bf16 %v412
        %v589 = vunpack.c.l.s8.bf16 %v413
        %v590 = vunpack.c.h.s8.bf16 %v398
        %v591 = vunpack.c.h.s8.bf16 %v399
        %v592 = vunpack.c.h.s8.bf16 %v400
        %v593 = vunpack.c.h.s8.bf16 %v401
        %v594 = vunpack.c.h.s8.bf16 %v402
        %v595 = vunpack.c.h.s8.bf16 %v403
        %v596 = vunpack.c.h.s8.bf16 %v404
        %v597 = vunpack.c.h.s8.bf16 %v405
        %v598 = vunpack.c.h.s8.bf16 %v406
        %v599 = vunpack.c.h.s8.bf16 %v407
        %v600 = vunpack.c.h.s8.bf16 %v408
        %v601 = vunpack.c.h.s8.bf16 %v409
        %v602 = vunpack.c.h.s8.bf16 %v410
        %v603 = vunpack.c.h.s8.bf16 %v411
        %v604 = vunpack.c.h.s8.bf16 %v412
        %v605 = vunpack.c.h.s8.bf16 %v413
        %v606 = vunpack.c.l.s8.bf16 %v414
        %v607 = vunpack.c.l.s8.bf16 %v415
        %v608 = vunpack.c.l.s8.bf16 %v416
        %v609 = vunpack.c.l.s8.bf16 %v417
        %v610 = vunpack.c.l.s8.bf16 %v418
        %v611 = vunpack.c.l.s8.bf16 %v419
        %v612 = vunpack.c.l.s8.bf16 %v420
        %v613 = vunpack.c.l.s8.bf16 %v421
        %v614 = vunpack.c.l.s8.bf16 %v422
        %v615 = vunpack.c.l.s8.bf16 %v423
        %v616 = vunpack.c.l.s8.bf16 %v424
        %v617 = vunpack.c.l.s8.bf16 %v425
        %v618 = vunpack.c.l.s8.bf16 %v426
        %v619 = vunpack.c.l.s8.bf16 %v427
        %v620 = vunpack.c.l.s8.bf16 %v428
        %v621 = vunpack.c.l.s8.bf16 %v429
        %v622 = vunpack.c.h.s8.bf16 %v414
        %v623 = vunpack.c.h.s8.bf16 %v415
        %v624 = vunpack.c.h.s8.bf16 %v416
        %v625 = vunpack.c.h.s8.bf16 %v417
        %v626 = vunpack.c.h.s8.bf16 %v418
        %v627 = vunpack.c.h.s8.bf16 %v419
        %v628 = vunpack.c.h.s8.bf16 %v420
        %v629 = vunpack.c.h.s8.bf16 %v421
        %v630 = vunpack.c.h.s8.bf16 %v422
        %v631 = vunpack.c.h.s8.bf16 %v423
        %v632 = vunpack.c.h.s8.bf16 %v424
        %v633 = vunpack.c.h.s8.bf16 %v425
        %v634 = vunpack.c.h.s8.bf16 %v426
        %v635 = vunpack.c.h.s8.bf16 %v427
        %v636 = vunpack.c.h.s8.bf16 %v428
        %v637 = vunpack.c.h.s8.bf16 %v429
        %v638 = vunpack.c.l.s8.bf16 %v430
        %v639 = vunpack.c.l.s8.bf16 %v431
        %v640 = vunpack.c.l.s8.bf16 %v432
        %v641 = vunpack.c.l.s8.bf16 %v433
        %v642 = vunpack.c.l.s8.bf16 %v434
        %v643 = vunpack.c.l.s8.bf16 %v435
        %v644 = vunpack.c.l.s8.bf16 %v436
        %v645 = vunpack.c.l.s8.bf16 %v437
        %v646 = vunpack.c.l.s8.bf16 %v438
        %v647 = vunpack.c.l.s8.bf16 %v439
        %v648 = vunpack.c.l.s8.bf16 %v440
        %v649 = vunpack.c.l.s8.bf16 %v441
        %v650 = vunpack.c.l.s8.bf16 %v442
        %v651 = vunpack.c.l.s8.bf16 %v443
        %v652 = vunpack.c.l.s8.bf16 %v444
        %v653 = vunpack.c.l.s8.bf16 %v445
        %v654 = vunpack.c.h.s8.bf16 %v430
        %v655 = vunpack.c.h.s8.bf16 %v431
        %v656 = vunpack.c.h.s8.bf16 %v432
        %v657 = vunpack.c.h.s8.bf16 %v433
        %v658 = vunpack.c.h.s8.bf16 %v434
        %v659 = vunpack.c.h.s8.bf16 %v435
        %v660 = vunpack.c.h.s8.bf16 %v436
        %v661 = vunpack.c.h.s8.bf16 %v437
        %v662 = vunpack.c.h.s8.bf16 %v438
        %v663 = vunpack.c.h.s8.bf16 %v439
        %v664 = vunpack.c.h.s8.bf16 %v440
        %v665 = vunpack.c.h.s8.bf16 %v441
        %v666 = vunpack.c.h.s8.bf16 %v442
        %v667 = vunpack.c.h.s8.bf16 %v443
        %v668 = vunpack.c.h.s8.bf16 %v444
        %v669 = vunpack.c.h.s8.bf16 %v445
        %v670 = vunpack.c.l.s8.bf16 %v446
        %v671 = vunpack.c.l.s8.bf16 %v447
        %v672 = vunpack.c.l.s8.bf16 %v448
        %v673 = vunpack.c.l.s8.bf16 %v449
        %v674 = vunpack.c.l.s8.bf16 %v450
        %v675 = vunpack.c.l.s8.bf16 %v451
        %v676 = vunpack.c.l.s8.bf16 %v452
        %v677 = vunpack.c.l.s8.bf16 %v453
        %v678 = vunpack.c.l.s8.bf16 %v454
        %v679 = vunpack.c.l.s8.bf16 %v455
        %v680 = vunpack.c.l.s8.bf16 %v456
        %v681 = vunpack.c.l.s8.bf16 %v457
        %v682 = vunpack.c.l.s8.bf16 %v458
        %v683 = vunpack.c.l.s8.bf16 %v459
        %v684 = vunpack.c.l.s8.bf16 %v460
        %v685 = vunpack.c.l.s8.bf16 %v461
        %v686 = vunpack.c.h.s8.bf16 %v446
        %v687 = vunpack.c.h.s8.bf16 %v447
        %v688 = vunpack.c.h.s8.bf16 %v448
        %v689 = vunpack.c.h.s8.bf16 %v449
        %v690 = vunpack.c.h.s8.bf16 %v450
        %v691 = vunpack.c.h.s8.bf16 %v451
        %v692 = vunpack.c.h.s8.bf16 %v452
        %v693 = vunpack.c.h.s8.bf16 %v453
        %v694 = vunpack.c.h.s8.bf16 %v454
        %v695 = vunpack.c.h.s8.bf16 %v455
        %v696 = vunpack.c.h.s8.bf16 %v456
        %v697 = vunpack.c.h.s8.bf16 %v457
        %v698 = vunpack.c.h.s8.bf16 %v458
        %v699 = vunpack.c.h.s8.bf16 %v459
        %v700 = vunpack.c.h.s8.bf16 %v460
        %v701 = vunpack.c.h.s8.bf16 %v461
        %v702 = vunpack.c.l.s8.bf16 %v462
        %v703 = vunpack.c.l.s8.bf16 %v463
        %v704 = vunpack.c.l.s8.bf16 %v464
        %v705 = vunpack.c.l.s8.bf16 %v465
        %v706 = vunpack.c.l.s8.bf16 %v466
        %v707 = vunpack.c.l.s8.bf16 %v467
        %v708 = vunpack.c.l.s8.bf16 %v468
        %v709 = vunpack.c.l.s8.bf16 %v469
        %v710 = vunpack.c.l.s8.bf16 %v470
        %v711 = vunpack.c.l.s8.bf16 %v471
        %v712 = vunpack.c.l.s8.bf16 %v472
        %v713 = vunpack.c.l.s8.bf16 %v473
        %v714 = vunpack.c.l.s8.bf16 %v474
        %v715 = vunpack.c.l.s8.bf16 %v475
        %v716 = vunpack.c.l.s8.bf16 %v476
        %v717 = vunpack.c.l.s8.bf16 %v477
        %v718 = vunpack.c.h.s8.bf16 %v462
        %v719 = vunpack.c.h.s8.bf16 %v463
        %v720 = vunpack.c.h.s8.bf16 %v464
        %v721 = vunpack.c.h.s8.bf16 %v465
        %v722 = vunpack.c.h.s8.bf16 %v466
        %v723 = vunpack.c.h.s8.bf16 %v467
        %v724 = vunpack.c.h.s8.bf16 %v468
        %v725 = vunpack.c.h.s8.bf16 %v469
        %v726 = vunpack.c.h.s8.bf16 %v470
        %v727 = vunpack.c.h.s8.bf16 %v471
        %v728 = vunpack.c.h.s8.bf16 %v472
        %v729 = vunpack.c.h.s8.bf16 %v473
        %v730 = vunpack.c.h.s8.bf16 %v474
        %v731 = vunpack.c.h.s8.bf16 %v475
        %v732 = vunpack.c.h.s8.bf16 %v476
        %v733 = vunpack.c.h.s8.bf16 %v477
        %734 = vmatprep.subr.bf16.mxu0 %v479
        %735 = vmatpush1.bf16.msra.mxu0 %v478
        %736 = vmatprep.subr.bf16.mxu0 %v495
        %737 = vmatpush1.bf16.msra.mxu0 %v494
        %738 = vmatprep.subr.bf16.mxu0 %v511
        %739 = vmatpush1.bf16.msra.mxu0 %v510
        %740 = vmatprep.subr.bf16.mxu0 %v527
        %741 = vmatpush1.bf16.msra.mxu0 %v526
        %742 = vmatprep.subr.bf16.mxu0 %v543
        %743 = vmatpush1.bf16.msra.mxu0 %v542
        %744 = vmatprep.subr.bf16.mxu0 %v559
        %745 = vmatpush1.bf16.msra.mxu0 %v558
        %746 = vmatprep.subr.bf16.mxu0 %v575
        %747 = vmatpush1.bf16.msra.mxu0 %v574
        %748 = vmatprep.subr.bf16.mxu0 %v591
        %749 = vmatpush1.bf16.msra.mxu0 %v590
        %750 = vmatprep.subr.bf16.mxu0 %v607
        %751 = vmatpush1.bf16.msra.mxu0 %v606
        %752 = vmatprep.subr.bf16.mxu0 %v623
        %753 = vmatpush1.bf16.msra.mxu0 %v622
        %754 = vmatprep.subr.bf16.mxu0 %v639
        %755 = vmatpush1.bf16.msra.mxu0 %v638
        %756 = vmatprep.subr.bf16.mxu0 %v655
        %757 = vmatpush1.bf16.msra.mxu0 %v654
        %758 = vmatprep.subr.bf16.mxu0 %v671
        %759 = vmatpush1.bf16.msra.mxu0 %v670
        %760 = vmatprep.subr.bf16.mxu0 %v687
        %761 = vmatpush1.bf16.msra.mxu0 %v686
        %762 = vmatprep.subr.bf16.mxu0 %v703
        %763 = vmatpush1.bf16.msra.mxu0 %v702
        %764 = vmatprep.subr.bf16.mxu0 %v719
        %765 = vmatpush1.bf16.msra.mxu0 %v718
        %766 = vmatprep.mubr.bf16.mxu0 %v349
        %767 = vmatmul.mubr.bf16.gmra.mrb[0].mxu0 %v348
        %v768 = vpop.f32.mrb[0].mxu0
        %v769 = vadd.f32 0.0, %v768
        %v770 = vpop.f32.mrb[0].mxu0
        %v771 = vadd.f32 0.0, %v770
        %v772 = vpop.f32.mrb[0].mxu0
        %v773 = vpop.f32.mrb[0].mxu0
        %774 = vdwg.mxu0
        %775 = vmatprep.subr.bf16.mxu0 %v481
        %776 = vmatpush1.bf16.msra.mxu0 %v480
        %777 = vmatprep.subr.bf16.mxu0 %v497
        %778 = vmatpush1.bf16.msra.mxu0 %v496
        %779 = vmatprep.subr.bf16.mxu0 %v513
        %780 = vmatpush1.bf16.msra.mxu0 %v512
        %781 = vmatprep.subr.bf16.mxu0 %v529
        %782 = vmatpush1.bf16.msra.mxu0 %v528
        %783 = vmatprep.subr.bf16.mxu0 %v545
        %784 = vmatpush1.bf16.msra.mxu0 %v544
        %785 = vmatprep.subr.bf16.mxu0 %v561
        %786 = vmatpush1.bf16.msra.mxu0 %v560
        %787 = vmatprep.subr.bf16.mxu0 %v577
        %788 = vmatpush1.bf16.msra.mxu0 %v576
        %789 = vmatprep.subr.bf16.mxu0 %v593
        %790 = vmatpush1.bf16.msra.mxu0 %v592
        %791 = vmatprep.subr.bf16.mxu0 %v609
        %792 = vmatpush1.bf16.msra.mxu0 %v608
        %793 = vmatprep.subr.bf16.mxu0 %v625
        %794 = vmatpush1.bf16.msra.mxu0 %v624
        %795 = vmatprep.subr.bf16.mxu0 %v641
        %796 = vmatpush1.bf16.msra.mxu0 %v640
        %797 = vmatprep.subr.bf16.mxu0 %v657
        %798 = vmatpush1.bf16.msra.mxu0 %v656
        %799 = vmatprep.subr.bf16.mxu0 %v673
        %800 = vmatpush1.bf16.msra.mxu0 %v672
        %801 = vmatprep.subr.bf16.mxu0 %v689
        %802 = vmatpush1.bf16.msra.mxu0 %v688
        %803 = vmatprep.subr.bf16.mxu0 %v705
        %804 = vmatpush1.bf16.msra.mxu0 %v704
        %805 = vmatprep.subr.bf16.mxu0 %v721
        %806 = vmatpush1.bf16.msra.mxu0 %v720
        %807 = vmatprep.mubr.bf16.mxu0 %v349
        %808 = vmatmul.mubr.bf16.gmra.mrb[0].mxu0 %v348
        %v809 = vpop.f32.mrb[0].mxu0
        %v810 = vadd.f32 0.0, %v809
        %v811 = vpop.f32.mrb[0].mxu0
        %v812 = vadd.f32 0.0, %v811
        %v813 = vpop.f32.mrb[0].mxu0
        %v814 = vpop.f32.mrb[0].mxu0
        %815 = vdwg.mxu0
        %816 = vmatprep.subr.bf16.mxu0 %v483
        %817 = vmatpush1.bf16.msra.mxu0 %v482
        %818 = vmatprep.subr.bf16.mxu0 %v499
        %819 = vmatpush1.bf16.msra.mxu0 %v498
        %820 = vmatprep.subr.bf16.mxu0 %v515
        %821 = vmatpush1.bf16.msra.mxu0 %v514
        %822 = vmatprep.subr.bf16.mxu0 %v531
        %823 = vmatpush1.bf16.msra.mxu0 %v530
        %824 = vmatprep.subr.bf16.mxu0 %v547
        %825 = vmatpush1.bf16.msra.mxu0 %v546
        %826 = vmatprep.subr.bf16.mxu0 %v563
        %827 = vmatpush1.bf16.msra.mxu0 %v562
        %828 = vmatprep.subr.bf16.mxu0 %v579
        %829 = vmatpush1.bf16.msra.mxu0 %v578
        %830 = vmatprep.subr.bf16.mxu0 %v595
        %831 = vmatpush1.bf16.msra.mxu0 %v594
        %832 = vmatprep.subr.bf16.mxu0 %v611
        %833 = vmatpush1.bf16.msra.mxu0 %v610
        %834 = vmatprep.subr.bf16.mxu0 %v627
        %835 = vmatpush1.bf16.msra.mxu0 %v626
        %836 = vmatprep.subr.bf16.mxu0 %v643
        %837 = vmatpush1.bf16.msra.mxu0 %v642
        %838 = vmatprep.subr.bf16.mxu0 %v659
        %839 = vmatpush1.bf16.msra.mxu0 %v658
        %840 = vmatprep.subr.bf16.mxu0 %v675
        %841 = vmatpush1.bf16.msra.mxu0 %v674
        %842 = vmatprep.subr.bf16.mxu0 %v691
        %843 = vmatpush1.bf16.msra.mxu0 %v690
        %844 = vmatprep.subr.bf16.mxu0 %v707
        %845 = vmatpush1.bf16.msra.mxu0 %v706
        %846 = vmatprep.subr.bf16.mxu0 %v723
        %847 = vmatpush1.bf16.msra.mxu0 %v722
        %848 = vmatprep.mubr.bf16.mxu0 %v349
        %849 = vmatmul.mubr.bf16.gmra.mrb[0].mxu0 %v348
        %v850 = vpop.f32.mrb[0].mxu0
        %v851 = vadd.f32 0.0, %v850
        %v852 = vpop.f32.mrb[0].mxu0
        %v853 = vadd.f32 0.0, %v852
        %v854 = vpop.f32.mrb[0].mxu0
        %v855 = vpop.f32.mrb[0].mxu0
        %856 = vdwg.mxu0
        %857 = vmatprep.subr.bf16.mxu0 %v485
        %858 = vmatpush1.bf16.msra.mxu0 %v484
        %859 = vmatprep.subr.bf16.mxu0 %v501
        %860 = vmatpush1.bf16.msra.mxu0 %v500
        %861 = vmatprep.subr.bf16.mxu0 %v517
        %862 = vmatpush1.bf16.msra.mxu0 %v516
        %863 = vmatprep.subr.bf16.mxu0 %v533
        %864 = vmatpush1.bf16.msra.mxu0 %v532
        %865 = vmatprep.subr.bf16.mxu0 %v549
        %866 = vmatpush1.bf16.msra.mxu0 %v548
        %867 = vmatprep.subr.bf16.mxu0 %v565
        %868 = vmatpush1.bf16.msra.mxu0 %v564
        %869 = vmatprep.subr.bf16.mxu0 %v581
        %870 = vmatpush1.bf16.msra.mxu0 %v580
        %871 = vmatprep.subr.bf16.mxu0 %v597
        %872 = vmatpush1.bf16.msra.mxu0 %v596
        %873 = vmatprep.subr.bf16.mxu0 %v613
        %874 = vmatpush1.bf16.msra.mxu0 %v612
        %875 = vmatprep.subr.bf16.mxu0 %v629
        %876 = vmatpush1.bf16.msra.mxu0 %v628
        %877 = vmatprep.subr.bf16.mxu0 %v645
        %878 = vmatpush1.bf16.msra.mxu0 %v644
        %879 = vmatprep.subr.bf16.mxu0 %v661
        %880 = vmatpush1.bf16.msra.mxu0 %v660
        %881 = vmatprep.subr.bf16.mxu0 %v677
        %882 = vmatpush1.bf16.msra.mxu0 %v676
        %883 = vmatprep.subr.bf16.mxu0 %v693
        %884 = vmatpush1.bf16.msra.mxu0 %v692
        %885 = vmatprep.subr.bf16.mxu0 %v709
        %886 = vmatpush1.bf16.msra.mxu0 %v708
        %887 = vmatprep.subr.bf16.mxu0 %v725
        %888 = vmatpush1.bf16.msra.mxu0 %v724
        %889 = vmatprep.mubr.bf16.mxu0 %v349
        %890 = vmatmul.mubr.bf16.gmra.mrb[0].mxu0 %v348
        %v891 = vpop.f32.mrb[0].mxu0
        %v892 = vadd.f32 0.0, %v891
        %v893 = vpop.f32.mrb[0].mxu0
        %v894 = vadd.f32 0.0, %v893
        %v895 = vpop.f32.mrb[0].mxu0
        %v896 = vpop.f32.mrb[0].mxu0
        %897 = vdwg.mxu0
        %898 = vmatprep.subr.bf16.mxu0 %v487
        %899 = vmatpush1.bf16.msra.mxu0 %v486
        %900 = vmatprep.subr.bf16.mxu0 %v503
        %901 = vmatpush1.bf16.msra.mxu0 %v502
        %902 = vmatprep.subr.bf16.mxu0 %v519
        %903 = vmatpush1.bf16.msra.mxu0 %v518
        %904 = vmatprep.subr.bf16.mxu0 %v535
        %905 = vmatpush1.bf16.msra.mxu0 %v534
        %906 = vmatprep.subr.bf16.mxu0 %v551
        %907 = vmatpush1.bf16.msra.mxu0 %v550
        %908 = vmatprep.subr.bf16.mxu0 %v567
        %909 = vmatpush1.bf16.msra.mxu0 %v566
        %910 = vmatprep.subr.bf16.mxu0 %v583
        %911 = vmatpush1.bf16.msra.mxu0 %v582
        %912 = vmatprep.subr.bf16.mxu0 %v599
        %913 = vmatpush1.bf16.msra.mxu0 %v598
        %914 = vmatprep.subr.bf16.mxu0 %v615
        %915 = vmatpush1.bf16.msra.mxu0 %v614
        %916 = vmatprep.subr.bf16.mxu0 %v631
        %917 = vmatpush1.bf16.msra.mxu0 %v630
        %918 = vmatprep.subr.bf16.mxu0 %v647
        %919 = vmatpush1.bf16.msra.mxu0 %v646
        %920 = vmatprep.subr.bf16.mxu0 %v663
        %921 = vmatpush1.bf16.msra.mxu0 %v662
        %922 = vmatprep.subr.bf16.mxu0 %v679
        %923 = vmatpush1.bf16.msra.mxu0 %v678
        %924 = vmatprep.subr.bf16.mxu0 %v695
        %925 = vmatpush1.bf16.msra.mxu0 %v694
        %926 = vmatprep.subr.bf16.mxu0 %v711
        %927 = vmatpush1.bf16.msra.mxu0 %v710
        %928 = vmatprep.subr.bf16.mxu0 %v727
        %929 = vmatpush1.bf16.msra.mxu0 %v726
        %930 = vmatprep.mubr.bf16.mxu0 %v349
        %931 = vmatmul.mubr.bf16.gmra.mrb[0].mxu0 %v348
        %v932 = vpop.f32.mrb[0].mxu0
        %v933 = vadd.f32 0.0, %v932
        %v934 = vpop.f32.mrb[0].mxu0
        %v935 = vadd.f32 0.0, %v934
        %v936 = vpop.f32.mrb[0].mxu0
        %v937 = vpop.f32.mrb[0].mxu0
        %938 = vdwg.mxu0
        %939 = vmatprep.subr.bf16.mxu0 %v489
        %940 = vmatpush1.bf16.msra.mxu0 %v488
        %941 = vmatprep.subr.bf16.mxu0 %v505
        %942 = vmatpush1.bf16.msra.mxu0 %v504
        %943 = vmatprep.subr.bf16.mxu0 %v521
        %944 = vmatpush1.bf16.msra.mxu0 %v520
        %945 = vmatprep.subr.bf16.mxu0 %v537
        %946 = vmatpush1.bf16.msra.mxu0 %v536
        %947 = vmatprep.subr.bf16.mxu0 %v553
        %948 = vmatpush1.bf16.msra.mxu0 %v552
        %949 = vmatprep.subr.bf16.mxu0 %v569
        %950 = vmatpush1.bf16.msra.mxu0 %v568
        %951 = vmatprep.subr.bf16.mxu0 %v585
        %952 = vmatpush1.bf16.msra.mxu0 %v584
        %953 = vmatprep.subr.bf16.mxu0 %v601
        %954 = vmatpush1.bf16.msra.mxu0 %v600
        %955 = vmatprep.subr.bf16.mxu0 %v617
        %956 = vmatpush1.bf16.msra.mxu0 %v616
        %957 = vmatprep.subr.bf16.mxu0 %v633
        %958 = vmatpush1.bf16.msra.mxu0 %v632
        %959 = vmatprep.subr.bf16.mxu0 %v649
        %960 = vmatpush1.bf16.msra.mxu0 %v648
        %961 = vmatprep.subr.bf16.mxu0 %v665
        %962 = vmatpush1.bf16.msra.mxu0 %v664
        %963 = vmatprep.subr.bf16.mxu0 %v681
        %964 = vmatpush1.bf16.msra.mxu0 %v680
        %965 = vmatprep.subr.bf16.mxu0 %v697
        %966 = vmatpush1.bf16.msra.mxu0 %v696
        %967 = vmatprep.subr.bf16.mxu0 %v713
        %968 = vmatpush1.bf16.msra.mxu0 %v712
        %969 = vmatprep.subr.bf16.mxu0 %v729
        %970 = vmatpush1.bf16.msra.mxu0 %v728
        %971 = vmatprep.mubr.bf16.mxu0 %v349
        %972 = vmatmul.mubr.bf16.gmra.mrb[0].mxu0 %v348
        %v973 = vpop.f32.mrb[0].mxu0
        %v974 = vadd.f32 0.0, %v973
        %v975 = vpop.f32.mrb[0].mxu0
        %v976 = vadd.f32 0.0, %v975
        %v977 = vpop.f32.mrb[0].mxu0
        %v978 = vpop.f32.mrb[0].mxu0
        %979 = vdwg.mxu0
        %980 = vmatprep.subr.bf16.mxu0 %v491
        %981 = vmatpush1.bf16.msra.mxu0 %v490
        %982 = vmatprep.subr.bf16.mxu0 %v507
        %983 = vmatpush1.bf16.msra.mxu0 %v506
        %984 = vmatprep.subr.bf16.mxu0 %v523
        %985 = vmatpush1.bf16.msra.mxu0 %v522
        %986 = vmatprep.subr.bf16.mxu0 %v539
        %987 = vmatpush1.bf16.msra.mxu0 %v538
        %988 = vmatprep.subr.bf16.mxu0 %v555
        %989 = vmatpush1.bf16.msra.mxu0 %v554
        %990 = vmatprep.subr.bf16.mxu0 %v571
        %991 = vmatpush1.bf16.msra.mxu0 %v570
        %992 = vmatprep.subr.bf16.mxu0 %v587
        %993 = vmatpush1.bf16.msra.mxu0 %v586
        %994 = vmatprep.subr.bf16.mxu0 %v603
        %995 = vmatpush1.bf16.msra.mxu0 %v602
        %996 = vmatprep.subr.bf16.mxu0 %v619
        %997 = vmatpush1.bf16.msra.mxu0 %v618
        %998 = vmatprep.subr.bf16.mxu0 %v635
        %999 = vmatpush1.bf16.msra.mxu0 %v634
        %1000 = vmatprep.subr.bf16.mxu0 %v651
        %1001 = vmatpush1.bf16.msra.mxu0 %v650
        %1002 = vmatprep.subr.bf16.mxu0 %v667
        %1003 = vmatpush1.bf16.msra.mxu0 %v666
        %1004 = vmatprep.subr.bf16.mxu0 %v683
        %1005 = vmatpush1.bf16.msra.mxu0 %v682
        %1006 = vmatprep.subr.bf16.mxu0 %v699
        %1007 = vmatpush1.bf16.msra.mxu0 %v698
        %1008 = vmatprep.subr.bf16.mxu0 %v715
        %1009 = vmatpush1.bf16.msra.mxu0 %v714
        %1010 = vmatprep.subr.bf16.mxu0 %v731
        %1011 = vmatpush1.bf16.msra.mxu0 %v730
        %1012 = vmatprep.mubr.bf16.mxu0 %v349
        %1013 = vmatmul.mubr.bf16.gmra.mrb[0].mxu0 %v348
        %v1014 = vpop.f32.mrb[0].mxu0
        %v1015 = vadd.f32 0.0, %v1014
        %v1016 = vpop.f32.mrb[0].mxu0
        %v1017 = vadd.f32 0.0, %v1016
        %v1018 = vpop.f32.mrb[0].mxu0
        %v1019 = vpop.f32.mrb[0].mxu0
        %1020 = vdwg.mxu0
        %1021 = vmatprep.subr.bf16.mxu0 %v493
        %1022 = vmatpush1.bf16.msra.mxu0 %v492
        %1023 = vmatprep.subr.bf16.mxu0 %v509
        %1024 = vmatpush1.bf16.msra.mxu0 %v508
        %1025 = vmatprep.subr.bf16.mxu0 %v525
        %1026 = vmatpush1.bf16.msra.mxu0 %v524
        %1027 = vmatprep.subr.bf16.mxu0 %v541
        %1028 = vmatpush1.bf16.msra.mxu0 %v540
        %1029 = vmatprep.subr.bf16.mxu0 %v557
        %1030 = vmatpush1.bf16.msra.mxu0 %v556
        %1031 = vmatprep.subr.bf16.mxu0 %v573
        %1032 = vmatpush1.bf16.msra.mxu0 %v572
        %1033 = vmatprep.subr.bf16.mxu0 %v589
        %1034 = vmatpush1.bf16.msra.mxu0 %v588
        %1035 = vmatprep.subr.bf16.mxu0 %v605
        %1036 = vmatpush1.bf16.msra.mxu0 %v604
        %1037 = vmatprep.subr.bf16.mxu0 %v621
        %1038 = vmatpush1.bf16.msra.mxu0 %v620
        %1039 = vmatprep.subr.bf16.mxu0 %v637
        %1040 = vmatpush1.bf16.msra.mxu0 %v636
        %1041 = vmatprep.subr.bf16.mxu0 %v653
        %1042 = vmatpush1.bf16.msra.mxu0 %v652
        %1043 = vmatprep.subr.bf16.mxu0 %v669
        %1044 = vmatpush1.bf16.msra.mxu0 %v668
        %1045 = vmatprep.subr.bf16.mxu0 %v685
        %1046 = vmatpush1.bf16.msra.mxu0 %v684
        %1047 = vmatprep.subr.bf16.mxu0 %v701
        %1048 = vmatpush1.bf16.msra.mxu0 %v700
        %1049 = vmatprep.subr.bf16.mxu0 %v717
        %1050 = vmatpush1.bf16.msra.mxu0 %v716
        %1051 = vmatprep.subr.bf16.mxu0 %v733
        %1052 = vmatpush1.bf16.msra.mxu0 %v732
        %1053 = vmatprep.mubr.bf16.mxu0 %v349
        %1054 = vmatmul.mubr.bf16.gmra.mrb[0].mxu0 %v348
        %v1055 = vpop.f32.mrb[0].mxu0
        %v1056 = vadd.f32 0.0, %v1055
        %v1057 = vpop.f32.mrb[0].mxu0
        %v1058 = vadd.f32 0.0, %v1057
        %v1059 = vpop.f32.mrb[0].mxu0
        %v1060 = vpop.f32.mrb[0].mxu0
        %1061 = vdwg.mxu0
        %v1062 = vld [vmem:[%s266] sm:$0xff]
        %v1063 = vld [vmem:[%s266 + $0x8] sm:$0xff]
        %v1066 = vlaneseq
        %v1067 = vshrl.u32 %v1066, 7
        %v1068 = vsub.s32 0, %v1067
        %v1069 = vrot.slane %v1062, %v1068
        %v1070 = vlaneseq
        %v1071 = vshrl.u32 %v1070, 7
        %v1072 = vsub.s32 1, %v1071
        %v1073 = vrot.slane %v1062, %v1072
        %v1074 = vlaneseq
        %v1075 = vshrl.u32 %v1074, 7
        %v1076 = vsub.s32 2, %v1075
        %v1077 = vrot.slane %v1062, %v1076
        %v1078 = vlaneseq
        %v1079 = vshrl.u32 %v1078, 7
        %v1080 = vsub.s32 3, %v1079
        %v1081 = vrot.slane %v1062, %v1080
        %v1082 = vlaneseq
        %v1083 = vshrl.u32 %v1082, 7
        %v1084 = vsub.s32 4, %v1083
        %v1085 = vrot.slane %v1062, %v1084
        %v1086 = vlaneseq
        %v1087 = vshrl.u32 %v1086, 7
        %v1088 = vsub.s32 5, %v1087
        %v1089 = vrot.slane %v1062, %v1088
        %v1090 = vlaneseq
        %v1091 = vshrl.u32 %v1090, 7
        %v1092 = vsub.s32 6, %v1091
        %v1093 = vrot.slane %v1062, %v1092
        %v1094 = vlaneseq
        %v1095 = vshrl.u32 %v1094, 7
        %v1096 = vsub.s32 7, %v1095
        %v1097 = vrot.slane %v1062, %v1096
        %v1098 = vlaneseq
        %v1099 = vshrl.u32 %v1098, 7
        %v1100 = vsub.s32 0, %v1099
        %v1101 = vrot.slane %v1063, %v1100
        %v1102 = vlaneseq
        %v1103 = vshrl.u32 %v1102, 7
        %v1104 = vsub.s32 1, %v1103
        %v1105 = vrot.slane %v1063, %v1104
        %v1106 = vlaneseq
        %v1107 = vshrl.u32 %v1106, 7
        %v1108 = vsub.s32 2, %v1107
        %v1109 = vrot.slane %v1063, %v1108
        %v1110 = vlaneseq
        %v1111 = vshrl.u32 %v1110, 7
        %v1112 = vsub.s32 3, %v1111
        %v1113 = vrot.slane %v1063, %v1112
        %v1114 = vlaneseq
        %v1115 = vshrl.u32 %v1114, 7
        %v1116 = vsub.s32 4, %v1115
        %v1117 = vrot.slane %v1063, %v1116
        %v1118 = vlaneseq
        %v1119 = vshrl.u32 %v1118, 7
        %v1120 = vsub.s32 5, %v1119
        %v1121 = vrot.slane %v1063, %v1120
        %v1122 = vlaneseq
        %v1123 = vshrl.u32 %v1122, 7
        %v1124 = vsub.s32 6, %v1123
        %v1125 = vrot.slane %v1063, %v1124
        %v1126 = vlaneseq
        %v1127 = vshrl.u32 %v1126, 7
        %v1128 = vsub.s32 7, %v1127
        %v1129 = vrot.slane %v1063, %v1128
        %v1146 = vmul.f32 %v769, %v1069
        %v1147 = vmul.f32 %v771, %v1073
        %v1148 = vmul.f32 %v810, %v1077
        %v1149 = vmul.f32 %v812, %v1081
        %v1150 = vmul.f32 %v851, %v1085
        %v1151 = vmul.f32 %v853, %v1089
        %v1152 = vmul.f32 %v892, %v1093
        %v1153 = vmul.f32 %v894, %v1097
        %v1154 = vmul.f32 %v933, %v1101
        %v1155 = vmul.f32 %v935, %v1105
        %v1156 = vmul.f32 %v974, %v1109
        %v1157 = vmul.f32 %v976, %v1113
        %v1158 = vmul.f32 %v1015, %v1117
        %v1159 = vmul.f32 %v1017, %v1121
        %v1160 = vmul.f32 %v1056, %v1125
        %v1161 = vmul.f32 %v1058, %v1129
        %v1162 = vld [vmem:[%s275] sm:$0xff]
        %v1163 = vld [vmem:[%s275 + $0x8] sm:$0xff]
        %v1166 = vlaneseq
        %v1167 = vshrl.u32 %v1166, 7
        %v1168 = vsub.s32 0, %v1167
        %v1169 = vrot.slane %v1162, %v1168
        %v1170 = vlaneseq
        %v1171 = vshrl.u32 %v1170, 7
        %v1172 = vsub.s32 1, %v1171
        %v1173 = vrot.slane %v1162, %v1172
        %v1174 = vlaneseq
        %v1175 = vshrl.u32 %v1174, 7
        %v1176 = vsub.s32 2, %v1175
        %v1177 = vrot.slane %v1162, %v1176
        %v1178 = vlaneseq
        %v1179 = vshrl.u32 %v1178, 7
        %v1180 = vsub.s32 3, %v1179
        %v1181 = vrot.slane %v1162, %v1180
        %v1182 = vlaneseq
        %v1183 = vshrl.u32 %v1182, 7
        %v1184 = vsub.s32 4, %v1183
        %v1185 = vrot.slane %v1162, %v1184
        %v1186 = vlaneseq
        %v1187 = vshrl.u32 %v1186, 7
        %v1188 = vsub.s32 5, %v1187
        %v1189 = vrot.slane %v1162, %v1188
        %v1190 = vlaneseq
        %v1191 = vshrl.u32 %v1190, 7
        %v1192 = vsub.s32 6, %v1191
        %v1193 = vrot.slane %v1162, %v1192
        %v1194 = vlaneseq
        %v1195 = vshrl.u32 %v1194, 7
        %v1196 = vsub.s32 7, %v1195
        %v1197 = vrot.slane %v1162, %v1196
        %v1198 = vlaneseq
        %v1199 = vshrl.u32 %v1198, 7
        %v1200 = vsub.s32 0, %v1199
        %v1201 = vrot.slane %v1163, %v1200
        %v1202 = vlaneseq
        %v1203 = vshrl.u32 %v1202, 7
        %v1204 = vsub.s32 1, %v1203
        %v1205 = vrot.slane %v1163, %v1204
        %v1206 = vlaneseq
        %v1207 = vshrl.u32 %v1206, 7
        %v1208 = vsub.s32 2, %v1207
        %v1209 = vrot.slane %v1163, %v1208
        %v1210 = vlaneseq
        %v1211 = vshrl.u32 %v1210, 7
        %v1212 = vsub.s32 3, %v1211
        %v1213 = vrot.slane %v1163, %v1212
        %v1214 = vlaneseq
        %v1215 = vshrl.u32 %v1214, 7
        %v1216 = vsub.s32 4, %v1215
        %v1217 = vrot.slane %v1163, %v1216
        %v1218 = vlaneseq
        %v1219 = vshrl.u32 %v1218, 7
        %v1220 = vsub.s32 5, %v1219
        %v1221 = vrot.slane %v1163, %v1220
        %v1222 = vlaneseq
        %v1223 = vshrl.u32 %v1222, 7
        %v1224 = vsub.s32 6, %v1223
        %v1225 = vrot.slane %v1163, %v1224
        %v1226 = vlaneseq
        %v1227 = vshrl.u32 %v1226, 7
        %v1228 = vsub.s32 7, %v1227
        %v1229 = vrot.slane %v1163, %v1228
        %v1246 = vadd.f32 %v1146, %v1169
        %v1247 = vadd.f32 %v1147, %v1173
        %v1248 = vadd.f32 %v1148, %v1177
        %v1249 = vadd.f32 %v1149, %v1181
        %v1250 = vadd.f32 %v1150, %v1185
        %v1251 = vadd.f32 %v1151, %v1189
        %v1252 = vadd.f32 %v1152, %v1193
        %v1253 = vadd.f32 %v1153, %v1197
        %v1254 = vadd.f32 %v1154, %v1201
        %v1255 = vadd.f32 %v1155, %v1205
        %v1256 = vadd.f32 %v1156, %v1209
        %v1257 = vadd.f32 %v1157, %v1213
        %v1258 = vadd.f32 %v1158, %v1217
        %v1259 = vadd.f32 %v1159, %v1221
        %v1260 = vadd.f32 %v1160, %v1225
        %v1261 = vadd.f32 %v1161, %v1229
        %v1278 = vcombine.low %v1246, %v1247
        %v1279 = vcombine.low %v1248, %v1249
        %v1281 = vunpack.c.l.s4 1983009808
        %v1282 = vunpack.c.0.s8 %v1281
        %v1283 = vlaneseq
        %v1284 = vshrl.u32 %v1283, 7
        %v1285 = vsub.s32 %v1282, %v1284
        %v1286 = vrot.slane %v1278, %v1285
        %v1288 = vunpack.c.l.s4 1983009808
        %v1289 = vunpack.c.0.s8 %v1288
        %v1290 = vlaneseq
        %v1291 = vshrl.u32 %v1290, 7
        %v1292 = vsub.s32 %v1289, %v1291
        %v1293 = vrot.slane %v1279, %v1292
        %v1294 = vcombine.low %v1286, %v1293
        %v1295 = vcombine.low %v1250, %v1251
        %v1296 = vcombine.low %v1252, %v1253
        %v1298 = vunpack.c.l.s4 1983009808
        %v1299 = vunpack.c.0.s8 %v1298
        %v1300 = vlaneseq
        %v1301 = vshrl.u32 %v1300, 7
        %v1302 = vsub.s32 %v1299, %v1301
        %v1303 = vrot.slane %v1295, %v1302
        %v1305 = vunpack.c.l.s4 1983009808
        %v1306 = vunpack.c.0.s8 %v1305
        %v1307 = vlaneseq
        %v1308 = vshrl.u32 %v1307, 7
        %v1309 = vsub.s32 %v1306, %v1308
        %v1310 = vrot.slane %v1296, %v1309
        %v1311 = vcombine.low %v1303, %v1310
        %v1312 = vcombine.low %v1254, %v1255
        %v1313 = vcombine.low %v1256, %v1257
        %v1315 = vunpack.c.l.s4 1983009808
        %v1316 = vunpack.c.0.s8 %v1315
        %v1317 = vlaneseq
        %v1318 = vshrl.u32 %v1317, 7
        %v1319 = vsub.s32 %v1316, %v1318
        %v1320 = vrot.slane %v1312, %v1319
        %v1322 = vunpack.c.l.s4 1983009808
        %v1323 = vunpack.c.0.s8 %v1322
        %v1324 = vlaneseq
        %v1325 = vshrl.u32 %v1324, 7
        %v1326 = vsub.s32 %v1323, %v1325
        %v1327 = vrot.slane %v1313, %v1326
        %v1328 = vcombine.low %v1320, %v1327
        %v1329 = vcombine.low %v1258, %v1259
        %v1330 = vcombine.low %v1260, %v1261
        %v1332 = vunpack.c.l.s4 1983009808
        %v1333 = vunpack.c.0.s8 %v1332
        %v1334 = vlaneseq
        %v1335 = vshrl.u32 %v1334, 7
        %v1336 = vsub.s32 %v1333, %v1335
        %v1337 = vrot.slane %v1329, %v1336
        %v1339 = vunpack.c.l.s4 1983009808
        %v1340 = vunpack.c.0.s8 %v1339
        %v1341 = vlaneseq
        %v1342 = vshrl.u32 %v1341, 7
        %v1343 = vsub.s32 %v1340, %v1342
        %v1344 = vrot.slane %v1330, %v1343
        %v1345 = vcombine.low %v1337, %v1344
        %1350 = vst [vmem:[%s334] sm:$0xff] %v1294
        %1351 = vst [vmem:[%s334 + $0x8] sm:$0xff] %v1311
        %1352 = vst [vmem:[%s334 + $0x10] sm:$0xff] %v1328
        %1353 = vst [vmem:[%s334 + $0x18] sm:$0xff] %v1345
        %s1354 = smul.u32 16, %s25
        %p1355 = scmp.lt.s32.totalorder %s26, 0
        %s1356 = scalar_select %p1355, %s26, 0
        %p1357 = scmp.lt.s32.totalorder %s1354, 63
        %s1358 = scalar_select %p1357, %s1354, 63
        %s1359 = smul.addr %s1356, 64
        %s1360 = sadd.s32 %s1358, %s1359
        %s1361 = smul.addr %s1360, 2
        %s1362 = scalar_lea.vmem %s4, %s1361
        // Predicated region
        $region49: #{mask_branch_forward.1} parent=35 // pred_check
          %p1363 = pneg %p157
        $region50: #{mask_branch_forward.1} parent=35 // pred_check_branch
          %1365 = sbr.rel (%p1363) target = $region52
        $region51: #{mask_branch_forward.1} parent=35 // pred_region
          %s1366 = smul.u32 16, %s25
        $region52: #{mask_branch_forward.1} parent=35 // pred_fallthru
          _
      $region36: #{mask_branch_forward.1} parent=5 // pred_fallthru
        _
      %p1367 = scmp.le.s32.totalorder 2, %s16
      // Predicated region
      $region53: #{mask_branch_forward.1} parent=5 // pred_check
        %p1368 = pneg %p1367
      $region54: #{mask_branch_forward.1} parent=5 // pred_check_branch
        %1370 = sbr.rel (%p1368) target = $region56
      $region55: #{mask_branch_forward.1} parent=5 // pred_region
        %s1371 = ssub.s32 %s16, 2
        // Predicated region
        $region57: #{mask_branch_forward.1} parent=55 // pred_check
          %p1372 = pneg %p163
        $region58: #{mask_branch_forward.1} parent=55 // pred_check_branch
          %1374 = sbr.rel (%p1372) target = $region60
        $region59: #{mask_branch_forward.1} parent=55 // pred_region
          %s1375 = smul.u32 16, %s27
          %p1376 = scmp.lt.s32.totalorder %s28, 0
          %s1377 = scalar_select %p1376, %s28, 0
          %p1378 = scmp.lt.s32.totalorder %s1375, 63
          %s1379 = scalar_select %p1378, %s1375, 63
          %s1380 = smul.addr %s1377, 64
          %s1381 = sadd.s32 %s1379, %s1380
          %s1382 = smul.addr %s1381, 2
          %s1383 = scalar_lea.vmem %s4, %s1382
        $region60: #{mask_branch_forward.1} parent=55 // pred_fallthru
          _
      $region56: #{mask_branch_forward.1} parent=5 // pred_fallthru
        _
    $region6: #{mask_branch_forward.1} parent=1 // loop_footer
      %s20 = sadd.s32 1, %s16
    $region7: #{mask_branch_forward.1} parent=1 // loop_footer_branch
      %15 = sbr.rel target = $region3
    $region8: #{mask_branch_forward.1} parent=1 // loop_exit
      _
    %1384 = vsyncpa [#allocation3], 1
    %s1385 = scalar_lea.sflag [#allocation3], 1
    %1386 = vsyncpa %s1385, 1
    %1387 = vsyncpa [#allocation5], 1
    %s1388 = scalar_lea.sflag [#allocation5], 1
    %1389 = vsyncpa %s1388, 1

</llo_original>
